<compile_context>
chip_gen: v5e
topology: v5e:2x2
jax: 0.10.0
libtpu: 0.0.40
codegen_flags: <defaults>
</compile_context>

<pallas_src>
import functools

import jax
import jax.numpy as jnp
from jax.experimental import pallas as pl
from jax.experimental.pallas import tpu as pltpu

_LANE_WIDTH = 512     # last-dim tile width, multiple of 128 (lane-dense)
_MAX_ROW_TILE = 512   # sublane tile cap (~1 MiB f32 per input per buffer)
_MIN_ROW_TILE = 8     # minimum f32 sublane tile
_MAX_OUTER = 2        # parallel partial-sum slices (2 TensorCores on v7x)
_PAD_PRED = -1.0e4    # exp(-|pad|) == 0 exactly -> zero loss contribution


def _loss_kernel(beta_ref, pred_ref, true_ref, bce_out_ref, f_out_ref,
                 acc_bce_ref, acc_f_ref, *, gamma, alpha):
    i = pl.program_id(1)
    n_inner = pl.num_programs(1)

    @pl.when(i == 0)
    def _():
        acc_bce_ref[...] = jnp.zeros_like(acc_bce_ref)
        acc_f_ref[...] = jnp.zeros_like(acc_f_ref)

    x = pred_ref[...].astype(jnp.float32)
    y = true_ref[...].astype(jnp.float32)
    beta = beta_ref[0, 0]

    # Reuse e = exp(-|x|) for both sigmoid(x) and the stable BCE log term.
    e = jnp.exp(-jnp.abs(x))
    recip = 1.0 / (1.0 + e)
    sig = jnp.where(x >= 0.0, recip, e * recip)

    # LSoftLoss target update (torch no-grad branch; forward math identical).
    y_upd = (beta * y + (1.0 - beta) * sig) * y

    # BCEWithLogitsLoss(reduction='none'), numerically stable form:
    #   max(x, 0) - x*z + log(1 + exp(-|x|))
    bce = jnp.maximum(x, 0.0) - x * y_upd + jnp.log1p(e)

    # Focal weighting, specialized at trace time on the Python float gamma.
    if gamma == 0.0:
        f = bce                                   # (1 - pt)**0 == 1 (torch too)
    else:
        one_m_pt = 1.0 - jnp.exp(-bce)
        if gamma == 1.0:
            w = one_m_pt
        elif gamma == 2.0:
            w = one_m_pt * one_m_pt
        else:
            w = jnp.power(one_m_pt, gamma)
        f = w * bce
    if alpha != 1.0:
        f = alpha * f

    # Vector accumulation: fold the (row_tile, W) tile onto (8, W) VMEM
    # accumulators with plain VPU adds; cross-lane reduce only at the end.
    rows, lanes = bce.shape
    n_sub = rows // 8
    acc_bce_ref[...] += jnp.sum(bce.reshape(n_sub, 8, lanes), axis=0)
    acc_f_ref[...] += jnp.sum(f.reshape(n_sub, 8, lanes), axis=0)

    @pl.when(i == n_inner - 1)
    def _():
        bce_out_ref[0, 0] = jnp.sum(acc_bce_ref[...])
        f_out_ref[0, 0] = jnp.sum(acc_f_ref[...])


def _round_up(v, m):
    return ((v + m - 1) // m) * m


def _pad_to_2d(arr, pad_value, padded_rows, lane_w):
    flat = arr.reshape(-1)
    padded_total = padded_rows * lane_w
    n = flat.shape[0]
    if padded_total > n:
        flat = jnp.pad(flat, (0, padded_total - n), constant_values=pad_value)
    return flat.reshape(padded_rows, lane_w)


def focal_controlled_standard_loss(y_pred, target, beta, primary_beta,
                                   gamma=0.0, alpha=1.0):
    """Matches FocalControlledStandardLoss.forward.

    Returns (F_loss, {'bce_loss': bce_mean, 'F_loss': F_loss}).
    `primary_beta` and target_primary are accepted but unused (as in torch).
    """
    y_true, _target_primary = target
    bs, s, o = y_true.shape
    total = bs * s * o

    W = _LANE_WIDTH
    n_rows = pl.cdiv(total, W)

    # Adaptive split: only use the 2-way parallel outer axis when each slice
    # gets at least one minimum-size tile; pick the largest row tile that
    # fits the VMEM budget and doesn't over-pad tiny inputs.
    n_outer = _MAX_OUTER if n_rows >= _MAX_OUTER * _MIN_ROW_TILE else 1
    row_tile = min(_MAX_ROW_TILE,
                   _round_up(pl.cdiv(n_rows, n_outer), _MIN_ROW_TILE))
    inner_tiles = pl.cdiv(n_rows, n_outer * row_tile)
    padded_rows = n_outer * inner_tiles * row_tile

    # Glue: flatten, pad with zero-contribution values, lane-dense reshape.
    y_pred_2d = _pad_to_2d(y_pred, _PAD_PRED, padded_rows, W)
    y_true_2d = _pad_to_2d(y_true, 0.0, padded_rows, W)
    beta_arr = jnp.asarray(beta, dtype=jnp.float32).reshape(1, 1)

    kernel = functools.partial(_loss_kernel, gamma=float(gamma),
                               alpha=float(alpha))

    data_spec = pl.BlockSpec((row_tile, W),
                             lambda c, i: (c * inner_tiles + i, 0))
    scalar_out_spec = pl.BlockSpec((1, 1), lambda c, i: (c, 0),
                                   memory_space=pltpu.SMEM)

    bce_part, f_part = pl.pallas_call(
        kernel,
        out_shape=(jax.ShapeDtypeStruct((n_outer, 1), jnp.float32),
                   jax.ShapeDtypeStruct((n_outer, 1), jnp.float32)),
        grid_spec=pltpu.PrefetchScalarGridSpec(
            num_scalar_prefetch=0,
            grid=(n_outer, inner_tiles),
            in_specs=[
                pl.BlockSpec((1, 1), lambda c, i: (0, 0),
                             memory_space=pltpu.SMEM),     # beta scalar
                data_spec,                                 # y_pred tile
                data_spec,                                 # y_true tile
            ],
            out_specs=[scalar_out_spec, scalar_out_spec],
            scratch_shapes=[pltpu.VMEM((8, W), jnp.float32),
                            pltpu.VMEM((8, W), jnp.float32)],
        ),
        compiler_params=pltpu.CompilerParams(
            dimension_semantics=("parallel", "arbitrary")),
    )(beta_arr, y_pred_2d, y_true_2d)

    inv_n = 1.0 / float(total)
    bce_loss = jnp.sum(bce_part) * inv_n
    f_loss = jnp.sum(f_part) * inv_n
    return f_loss, {"bce_loss": bce_loss, "F_loss": f_loss}


def _reference(y_pred, target, beta, gamma=0.0, alpha=1.0):
    y_true, _ = target
    bs, s, o = y_true.shape
    x = y_pred.reshape(bs * s, o).astype(jnp.float32)
    y = y_true.reshape(bs * s, o).astype(jnp.float32)
    y_upd = (beta * y + (1.0 - beta) * jax.nn.sigmoid(x)) * y
    bce = jnp.maximum(x, 0.0) - x * y_upd + jnp.log1p(jnp.exp(-jnp.abs(x)))
    pt = jnp.exp(-bce)
    f = alpha * jnp.power(1.0 - pt, gamma) * bce
    return f.mean(), bce.mean()


if __name__ == "__main__":
    key = jax.random.PRNGKey(0)
    k1, k2, k3 = jax.random.split(key, 3)

    bs, s, o = 2, 8, 32
    y_pred = jax.random.normal(k1, (bs, s, o), dtype=jnp.float32)
    y_true = (jax.random.uniform(k2, (bs, s, o)) > 0.5).astype(jnp.float32)
    target_primary = (jax.random.uniform(k3, (bs, s, o)) > 0.5).astype(jnp.float32)
    beta = 0.7
    primary_beta = 0.9

    # Default config (gamma=0, alpha=1), matching the module defaults.
    f_loss, aux = focal_controlled_standard_loss(
        y_pred, (y_true, target_primary), beta, primary_beta,
        gamma=0.0, alpha=1.0)
    jax.block_until_ready((f_loss, aux))
    ref_f, ref_bce = _reference(y_pred, (y_true, target_primary), beta,
                                gamma=0.0, alpha=1.0)
    assert jnp.allclose(f_loss, ref_f, atol=1e-5, rtol=1e-5)
    assert jnp.allclose(aux["bce_loss"], ref_bce, atol=1e-5, rtol=1e-5)
    assert jnp.allclose(aux["F_loss"], ref_f, atol=1e-5, rtol=1e-5)

    # Non-trivial focal config to exercise the gamma-specialized path.
    f2, aux2 = focal_controlled_standard_loss(
        y_pred, (y_true, target_primary), beta, primary_beta,
        gamma=2.0, alpha=0.25)
    jax.block_until_ready((f2, aux2))
    ref_f2, ref_bce2 = _reference(y_pred, (y_true, target_primary), beta,
                                  gamma=2.0, alpha=0.25)
    assert jnp.allclose(f2, ref_f2, atol=1e-5, rtol=1e-5)
    assert jnp.allclose(aux2["bce_loss"], ref_bce2, atol=1e-5, rtol=1e-5)

    # Larger, non-multiple-of-tile shape to exercise padding + 2-way split.
    k4, k5 = jax.random.split(k3)
    bs2, s2, o2 = 4, 37, 300
    yp = jax.random.normal(k4, (bs2, s2, o2), dtype=jnp.float32)
    yt = (jax.random.uniform(k5, (bs2, s2, o2)) > 0.5).astype(jnp.float32)
    f3, aux3 = focal_controlled_standard_loss(
        yp, (yt, yt), 0.3, 0.9, gamma=1.5, alpha=0.5)
    jax.block_until_ready((f3, aux3))
    ref_f3, ref_bce3 = _reference(yp, (yt, yt), 0.3, gamma=1.5, alpha=0.5)
    assert jnp.allclose(f3, ref_f3, atol=1e-5, rtol=1e-5)
    assert jnp.allclose(aux3["bce_loss"], ref_bce3, atol=1e-5, rtol=1e-5)

    print("KERNEL_OK")
</pallas_src>

<mosaic_0001>
module attributes {stable_mosaic.version = 11 : i64} {
  func.func @_loss_kernel(%arg0: i32, %arg1: i32, %arg2: memref<1x1xf32, #tpu.memory_space<smem>>, %arg3: memref<8x512xf32, #tpu.memory_space<vmem>>, %arg4: memref<8x512xf32, #tpu.memory_space<vmem>>, %arg5: memref<1x1xf32, #tpu.memory_space<smem>>, %arg6: memref<1x1xf32, #tpu.memory_space<smem>>, %arg7: memref<8x512xf32, #tpu.memory_space<vmem>>, %arg8: memref<8x512xf32, #tpu.memory_space<vmem>>) attributes {dimension_semantics = [#tpu.dimension_semantics<parallel>, #tpu.dimension_semantics<arbitrary>], iteration_bounds = array<i64: 1, 1>, scalar_prefetch = 0 : i64, scratch_operands = 2 : i64, tpu.core_type = #tpu.core_type<tc>, window_params = [{transform_indices = @transform_0, window_bounds = array<i64: 1, 1>}, {transform_indices = @transform_1, window_bounds = array<i64: 8, 512>}, {transform_indices = @transform_2, window_bounds = array<i64: 8, 512>}, {transform_indices = @transform_3, window_bounds = array<i64: 1, 1>}, {transform_indices = @transform_4, window_bounds = array<i64: 1, 1>}]} {
    %c0_i32 = arith.constant 0 : i32
    %0 = arith.cmpi eq, %arg1, %c0_i32 : i32
    %1 = arith.extui %0 : i1 to i32
    %c0_i32_0 = arith.constant 0 : i32
    %2 = arith.cmpi ne, %1, %c0_i32_0 : i32
    scf.if %2 {
      %cst_23 = arith.constant 0.000000e+00 : f32
      %44 = vector.broadcast %cst_23 : f32 to vector<8x512xf32>
      %c0_24 = arith.constant 0 : index
      %c0_25 = arith.constant 0 : index
      %45 = vector.load %arg7[%c0_24, %c0_25] : memref<8x512xf32, #tpu.memory_space<vmem>>, vector<8x512xf32>
      tpu.vector_store %arg7[%c0_24, %c0_25], %44 {strides = array<i32>} : memref<8x512xf32, #tpu.memory_space<vmem>>, vector<8x512xf32>,
      %cst_26 = arith.constant 0.000000e+00 : f32
      %46 = vector.broadcast %cst_26 : f32 to vector<8x512xf32>
      %c0_27 = arith.constant 0 : index
      %c0_28 = arith.constant 0 : index
      %47 = vector.load %arg8[%c0_27, %c0_28] : memref<8x512xf32, #tpu.memory_space<vmem>>, vector<8x512xf32>
      tpu.vector_store %arg8[%c0_27, %c0_28], %46 {strides = array<i32>} : memref<8x512xf32, #tpu.memory_space<vmem>>, vector<8x512xf32>,
    } else {
    }
    %c0 = arith.constant 0 : index
    %c0_1 = arith.constant 0 : index
    %3 = vector.load %arg3[%c0, %c0_1] : memref<8x512xf32, #tpu.memory_space<vmem>>, vector<8x512xf32>
    %c0_2 = arith.constant 0 : index
    %c0_3 = arith.constant 0 : index
    %4 = vector.load %arg4[%c0_2, %c0_3] : memref<8x512xf32, #tpu.memory_space<vmem>>, vector<8x512xf32>
    %c0_4 = arith.constant 0 : index
    %c0_5 = arith.constant 0 : index
    %5 = memref.load %arg2[%c0_4, %c0_5] : memref<1x1xf32, #tpu.memory_space<smem>>
    %6 = math.absf %3 : vector<8x512xf32>
    %cst = arith.constant 0.000000e+00 : f32
    %7 = vector.broadcast %cst : f32 to vector<8x512xf32>
    %8 = arith.subf %7, %6 : vector<8x512xf32>
    %9 = math.exp %8 : vector<8x512xf32>
    %cst_6 = arith.constant 1.000000e+00 : f32
    %10 = vector.broadcast %cst_6 : f32 to vector<8x512xf32>
    %11 = arith.addf %10, %9 : vector<8x512xf32>
    %cst_7 = arith.constant 1.000000e+00 : f32
    %12 = vector.broadcast %cst_7 : f32 to vector<8x512xf32>
    %13 = arith.divf %12, %11 : vector<8x512xf32>
    %cst_8 = arith.constant 0.000000e+00 : f32
    %14 = vector.broadcast %cst_8 : f32 to vector<8x512xf32>
    %15 = arith.cmpf oge, %3, %14 : vector<8x512xf32>
    %16 = arith.mulf %9, %13 : vector<8x512xf32>
    %17 = arith.select %15, %13, %16 : vector<8x512xi1>, vector<8x512xf32>
    %18 = vector.broadcast %5 : f32 to vector<8x512xf32>
    %19 = arith.mulf %18, %4 : vector<8x512xf32>
    %cst_9 = arith.constant 1.000000e+00 : f32
    %20 = arith.subf %cst_9, %5 : f32
    %21 = vector.broadcast %20 : f32 to vector<8x512xf32>
    %22 = arith.mulf %21, %17 : vector<8x512xf32>
    %23 = arith.addf %19, %22 : vector<8x512xf32>
    %24 = arith.mulf %23, %4 : vector<8x512xf32>
    %cst_10 = arith.constant 0.000000e+00 : f32
    %25 = vector.broadcast %cst_10 : f32 to vector<8x512xf32>
    %26 = arith.maximumf %3, %25 : vector<8x512xf32>
    %27 = arith.mulf %3, %24 : vector<8x512xf32>
    %28 = arith.subf %26, %27 : vector<8x512xf32>
    %29 = math.log1p %9 : vector<8x512xf32>
    %30 = arith.addf %28, %29 : vector<8x512xf32>
    %c0_11 = arith.constant 0 : index
    %c0_12 = arith.constant 0 : index
    %31 = vector.load %arg7[%c0_11, %c0_12] : memref<8x512xf32, #tpu.memory_space<vmem>>, vector<8x512xf32>
    %32 = vector.shape_cast %30 : vector<8x512xf32> to vector<1x8x512xf32>
    %cst_13 = arith.constant dense<0.000000e+00> : vector<8x512xf32>
    %33 = vector.multi_reduction <add>, %32, %cst_13 [0] : vector<1x8x512xf32> to vector<8x512xf32>
    %34 = arith.addf %31, %33 : vector<8x512xf32>
    %c0_14 = arith.constant 0 : index
    %c0_15 = arith.constant 0 : index
    %35 = vector.load %arg7[%c0_14, %c0_15] : memref<8x512xf32, #tpu.memory_space<vmem>>, vector<8x512xf32>
    tpu.vector_store %arg7[%c0_14, %c0_15], %34 {strides = array<i32>} : memref<8x512xf32, #tpu.memory_space<vmem>>, vector<8x512xf32>,
    %c0_16 = arith.constant 0 : index
    %c0_17 = arith.constant 0 : index
    %36 = vector.load %arg8[%c0_16, %c0_17] : memref<8x512xf32, #tpu.memory_space<vmem>>, vector<8x512xf32>
    %37 = vector.shape_cast %30 : vector<8x512xf32> to vector<1x8x512xf32>
    %cst_18 = arith.constant dense<0.000000e+00> : vector<8x512xf32>
    %38 = vector.multi_reduction <add>, %37, %cst_18 [0] : vector<1x8x512xf32> to vector<8x512xf32>
    %39 = arith.addf %36, %38 : vector<8x512xf32>
    %c0_19 = arith.constant 0 : index
    %c0_20 = arith.constant 0 : index
    %40 = vector.load %arg8[%c0_19, %c0_20] : memref<8x512xf32, #tpu.memory_space<vmem>>, vector<8x512xf32>
    tpu.vector_store %arg8[%c0_19, %c0_20], %39 {strides = array<i32>} : memref<8x512xf32, #tpu.memory_space<vmem>>, vector<8x512xf32>,
    %c0_i32_21 = arith.constant 0 : i32
    %41 = arith.cmpi eq, %arg1, %c0_i32_21 : i32
    %42 = arith.extui %41 : i1 to i32
    %c0_i32_22 = arith.constant 0 : i32
    %43 = arith.cmpi ne, %42, %c0_i32_22 : i32
    scf.if %43 {
      %c0_23 = arith.constant 0 : index
      %c0_24 = arith.constant 0 : index
      %44 = vector.load %arg7[%c0_23, %c0_24] : memref<8x512xf32, #tpu.memory_space<vmem>>, vector<8x512xf32>
      %45 = vector.shape_cast %44 : vector<8x512xf32> to vector<1x8x512xf32>
      %cst_25 = arith.constant dense<0.000000e+00> : vector<1xf32>
      %46 = vector.multi_reduction <add>, %45, %cst_25 [1, 2] : vector<1x8x512xf32> to vector<1xf32>
      %47 = vector.shape_cast %46 : vector<1xf32> to vector<1x1x1xf32>
      %48 = vector.extract %47[0, 0, 0] : f32 from vector<1x1x1xf32>
      %c0_26 = arith.constant 0 : index
      %c0_27 = arith.constant 0 : index
      %49 = memref.load %arg5[%c0_26, %c0_27] : memref<1x1xf32, #tpu.memory_space<smem>>
      memref.store %48, %arg5[%c0_26, %c0_27] : memref<1x1xf32, #tpu.memory_space<smem>>
      %c0_28 = arith.constant 0 : index
      %c0_29 = arith.constant 0 : index
      %50 = vector.load %arg8[%c0_28, %c0_29] : memref<8x512xf32, #tpu.memory_space<vmem>>, vector<8x512xf32>
      %51 = vector.shape_cast %50 : vector<8x512xf32> to vector<1x8x512xf32>
      %cst_30 = arith.constant dense<0.000000e+00> : vector<1xf32>
      %52 = vector.multi_reduction <add>, %51, %cst_30 [1, 2] : vector<1x8x512xf32> to vector<1xf32>
      %53 = vector.shape_cast %52 : vector<1xf32> to vector<1x1x1xf32>
      %54 = vector.extract %53[0, 0, 0] : f32 from vector<1x1x1xf32>
      %c0_31 = arith.constant 0 : index
      %c0_32 = arith.constant 0 : index
      %55 = memref.load %arg6[%c0_31, %c0_32] : memref<1x1xf32, #tpu.memory_space<smem>>
      memref.store %54, %arg6[%c0_31, %c0_32] : memref<1x1xf32, #tpu.memory_space<smem>>
    } else {
    }
    return
  }
  func.func @transform_0(%arg0: i32, %arg1: i32) -> (i32, i32) {
    %c0_i32 = arith.constant 0 : i32
    %c0_i32_0 = arith.constant 0 : i32
    %c0_i32_1 = arith.constant 0 : i32
    return %c0_i32, %c0_i32_0 : i32, i32
  }
  func.func @transform_1(%arg0: i32, %arg1: i32) -> (i32, i32) {
    %c1_i32 = arith.constant 1 : i32
    %0 = arith.muli %arg0, %c1_i32 : i32
    %1 = arith.addi %0, %arg1 : i32
    %c0_i32 = arith.constant 0 : i32
    %c0_i32_0 = arith.constant 0 : i32
    return %1, %c0_i32 : i32, i32
  }
  func.func @transform_2(%arg0: i32, %arg1: i32) -> (i32, i32) {
    %c1_i32 = arith.constant 1 : i32
    %0 = arith.muli %arg0, %c1_i32 : i32
    %1 = arith.addi %0, %arg1 : i32
    %c0_i32 = arith.constant 0 : i32
    %c0_i32_0 = arith.constant 0 : i32
    return %1, %c0_i32 : i32, i32
  }
  func.func @transform_3(%arg0: i32, %arg1: i32) -> (i32, i32) {
    %c0_i32 = arith.constant 0 : i32
    %c0_i32_0 = arith.constant 0 : i32
    return %arg0, %c0_i32 : i32, i32
  }
  func.func @transform_4(%arg0: i32, %arg1: i32) -> (i32, i32) {
    %c0_i32 = arith.constant 0 : i32
    %c0_i32_0 = arith.constant 0 : i32
    return %arg0, %c0_i32 : i32, i32
  }
}

</mosaic_0001>

<llo_original>
// kernel: tpu_custom_call.1
$region0: #{tpu_custom_call.1}
  #allocation0 [shape = 'u32[]', space=smem, size = 0x4, offset = 0x4, fixed_abs, tag = 'smem constant byte address 0x4 - core index']
  #allocation1 [shape = 'u32[72,128]{1,0:T(1,128)}', space=vmem, size = 0x9000, scoped, tag = 'internal scratch']
  #allocation2 [shape = 'f32[8,512]{1,0:T(8,128)}', space=vmem, size = 0x4000, scoped, tag = 'scratch operand']
  #allocation3 [shape = 'f32[8,512]{1,0:T(8,128)}', space=vmem, size = 0x4000, scoped, tag = 'scratch operand']
  #allocation4 [shape = 'f32[1,1]{1,0:T(1,128)S(6)}', space=smem, size = 0x200, scoped, tag = 'scoped memory for tpu_custom_call.1']
  %s0 = inlined_call_operand.<no memory space> [shape: f32[1,1], index: 0, kind: input, shape index: {}]
  %s1 = inlined_call_operand.hbm [shape: f32[8,512], index: 1, kind: input, shape index: {}]
  %s2 = inlined_call_operand.hbm [shape: f32[8,512], index: 2, kind: input, shape index: {}]
  %s3 = inlined_call_operand.hbm [shape: f32[1,1], index: 3, kind: output, shape index: {0}]
  %s4 = inlined_call_operand.hbm [shape: f32[1,1], index: 4, kind: output, shape index: {1}]
  %5 = xla_tuple %s3, %s4
  %s6 = sld [smem:[#allocation0]]
  $region46: #{tpu_custom_call.1} parent=0
    _
  %s8 = ssub.s32 1, %s6
  %s9 = scalar_select 0, %s8, %s6
  %10 = sst [smem:[#allocation4]] %s0
  $region1: #{tpu_custom_call.1} parent=0
    #allocation5 [shape = 'u8[16384]{0}', space=vmem, size = 0x4000, scoped, tag = 'input window, operand 1, single buffered']
    #allocation6 [shape = 's32[1]{0}', space=sflag, size = 0x4, scoped, tag = 'scoped memory for tpu_custom_call.1']
    #allocation7 [shape = 's32[1]{0}', space=sflag, size = 0x4, scoped, tag = 'scoped memory for tpu_custom_call.1']
    #allocation8 [shape = 'u8[16384]{0}', space=vmem, size = 0x4000, scoped, tag = 'input window, operand 2, single buffered']
    #allocation9 [shape = 's32[1]{0}', space=sflag, size = 0x4, scoped, tag = 'scoped memory for tpu_custom_call.1']
    #allocation10 [shape = 'u8[512]{0}', space=smem, size = 0x200, scoped, tag = 'output window, operand 0, single buffered']
    #allocation11 [shape = 'u8[512]{0}', space=smem, size = 0x200, scoped, tag = 'output window, operand 1, single buffered']
    #allocation12 [shape = 's32[1]{0}', space=sflag, size = 0x4, scoped, tag = 'scoped memory for tpu_custom_call.1']
    %11 = vsyncpa [#allocation6], 0
    %12 = vsyncpa [#allocation9], 0
    %13 = vsyncpa [#allocation7], 0
    %14 = vsyncpa [#allocation12], 0
    // Predicated region
    $region2: #{tpu_custom_call.1} parent=1 // pred_check
      _
    $region3: #{tpu_custom_call.1} parent=1 // pred_check_branch
      %16 = sbr.rel (0) target = $region5
    $region4: #{tpu_custom_call.1} parent=1 // pred_region
      _
    $region5: #{tpu_custom_call.1} parent=1 // pred_fallthru
      _
    // Predicated region
    $region6: #{tpu_custom_call.1} parent=1 // pred_check
      _
    $region7: #{tpu_custom_call.1} parent=1 // pred_check_branch
      %18 = sbr.rel (0) target = $region9
    $region8: #{tpu_custom_call.1} parent=1 // pred_region
      %s19 = sadd.s32 0, 0
      %21 = vsyncadd [#allocation6], 0
      %s22 = smul.addr %s19, 4
      %s23 = smul.addr %s22, 8
      %s24 = scalar_lea.hbm %s1, %s23
      %s26 = sshll.u32 %s24, 4
      %s27 = int_to_ptr.hbm [resolvable:$true] %s26
      %s28 = sshll.u32 [#allocation5], 4
      %s29 = int_to_ptr.vmem [resolvable:$true] %s28
      %31 = dma.hbm_to_vmem [thread:$0]  %s27, 512, %s29, [#allocation6]
    $region9: #{tpu_custom_call.1} parent=1 // pred_fallthru
      _
    // Predicated region
    $region10: #{tpu_custom_call.1} parent=1 // pred_check
      _
    $region11: #{tpu_custom_call.1} parent=1 // pred_check_branch
      %33 = sbr.rel (0) target = $region13
    $region12: #{tpu_custom_call.1} parent=1 // pred_region
      %s34 = sadd.s32 0, 0
      %36 = vsyncadd [#allocation9], 0
      %s37 = smul.addr %s34, 4
      %s38 = smul.addr %s37, 8
      %s39 = scalar_lea.hbm %s2, %s38
      %s41 = sshll.u32 %s39, 4
      %s42 = int_to_ptr.hbm [resolvable:$true] %s41
      %s43 = sshll.u32 [#allocation8], 4
      %s44 = int_to_ptr.vmem [resolvable:$true] %s43
      %46 = dma.hbm_to_vmem [thread:$0]  %s42, 512, %s44, [#allocation9]
    $region13: #{tpu_custom_call.1} parent=1 // pred_fallthru
      _
    // Predicated region
    $region14: #{tpu_custom_call.1} parent=1 // pred_check
      _
    $region15: #{tpu_custom_call.1} parent=1 // pred_check_branch
      %48 = sbr.rel (0) target = $region17
    $region16: #{tpu_custom_call.1} parent=1 // pred_region
      %50 = dma.done [#allocation6], 512
    $region17: #{tpu_custom_call.1} parent=1 // pred_fallthru
      _
    // Predicated region
    $region18: #{tpu_custom_call.1} parent=1 // pred_check
      _
    $region19: #{tpu_custom_call.1} parent=1 // pred_check_branch
      %52 = sbr.rel (0) target = $region21
    $region20: #{tpu_custom_call.1} parent=1 // pred_region
      %54 = dma.done [#allocation9], 512
    $region21: #{tpu_custom_call.1} parent=1 // pred_fallthru
      _
    %s55 = sadd.s32 0, 0
    %s56 = sadd.s32 0, 0
    %p57 = scmp.eq.s32.totalorder 0, 0
    // Predicated region
    $region22: #{tpu_custom_call.1} parent=1 // pred_check
      %p58 = pneg %p57
    $region23: #{tpu_custom_call.1} parent=1 // pred_check_branch
      %60 = sbr.rel (%p58) target = $region25
    $region24: #{tpu_custom_call.1} parent=1 // pred_region
      %61 = vst [vmem:[#allocation2] sm:$0xff] 0.0
      %62 = vst [vmem:[#allocation2 + $0x8] sm:$0xff] 0.0
      %63 = vst [vmem:[#allocation2 + $0x10] sm:$0xff] 0.0
      %64 = vst [vmem:[#allocation2 + $0x18] sm:$0xff] 0.0
      %65 = vst [vmem:[#allocation3] sm:$0xff] 0.0
      %66 = vst [vmem:[#allocation3 + $0x8] sm:$0xff] 0.0
      %67 = vst [vmem:[#allocation3 + $0x10] sm:$0xff] 0.0
      %68 = vst [vmem:[#allocation3 + $0x18] sm:$0xff] 0.0
    $region25: #{tpu_custom_call.1} parent=1 // pred_fallthru
      _
    %v69 = vld [vmem:[#allocation5] sm:$0xff]
    %v70 = vld [vmem:[#allocation5 + $0x8] sm:$0xff]
    %v71 = vld [vmem:[#allocation5 + $0x10] sm:$0xff]
    %v72 = vld [vmem:[#allocation5 + $0x18] sm:$0xff]
    %v73 = vld [vmem:[#allocation8] sm:$0xff]
    %v74 = vld [vmem:[#allocation8 + $0x8] sm:$0xff]
    %v75 = vld [vmem:[#allocation8 + $0x10] sm:$0xff]
    %v76 = vld [vmem:[#allocation8 + $0x18] sm:$0xff]
    %s77 = sld [smem:[#allocation4]]
    %v78 = vand.u32 2147483647, %v69
    %v79 = vand.u32 2147483647, %v70
    %v80 = vand.u32 2147483647, %v71
    %v81 = vand.u32 2147483647, %v72
    %v82 = vsub.f32 0.0, %v78
    %v83 = vsub.f32 0.0, %v79
    %v84 = vsub.f32 0.0, %v80
    %v85 = vsub.f32 0.0, %v81
    %v86 = vmul.f32 %v82, 1.442695
    %v87 = vpow.pop %v86
    %v88 = vmul.f32 %v83, 1.442695
    %v89 = vpow.pop %v88
    %v90 = vmul.f32 %v84, 1.442695
    %v91 = vpow.pop %v90
    %v92 = vmul.f32 %v85, 1.442695
    %v93 = vpow.pop %v92
    %v94 = vadd.f32 %v87, 1.0
    %v95 = vadd.f32 %v89, 1.0
    %v96 = vadd.f32 %v91, 1.0
    %v97 = vadd.f32 %v93, 1.0
    %v98 = vrcp.pop %v94
    %v99 = vmul.f32 %v94, %v98
    %v100 = vsub.f32 1.0, %v99
    %v101 = vmul.f32 %v98, %v100
    %v102 = vadd.f32 %v98, %v101
    %vm103 = vweird.f32 %v94
    %vm104 = vweird.f32 %v98
    %vm105 = vmor %vm103, %vm104
    %v106 = vsel %vm105, %v98, %v102
    %v107 = vand.u32 2147483647, %v94
    %vm108 = vcmp.eq.f32.partialorder %v107, 8.507059e+37
    %v109 = vand.u32 %v94, 2147483648
    %v110 = vor.u32 1.1754944e-38, %v109
    %v111 = vsel %vm108, %v110, %v106
    %v112 = vmul.f32 1.0, %v111
    %v113 = vrcp.pop %v95
    %v114 = vmul.f32 %v95, %v113
    %v115 = vsub.f32 1.0, %v114
    %v116 = vmul.f32 %v113, %v115
    %v117 = vadd.f32 %v113, %v116
    %vm118 = vweird.f32 %v95
    %vm119 = vweird.f32 %v113
    %vm120 = vmor %vm118, %vm119
    %v121 = vsel %vm120, %v113, %v117
    %v122 = vand.u32 2147483647, %v95
    %vm123 = vcmp.eq.f32.partialorder %v122, 8.507059e+37
    %v124 = vand.u32 %v95, 2147483648
    %v125 = vor.u32 1.1754944e-38, %v124
    %v126 = vsel %vm123, %v125, %v121
    %v127 = vmul.f32 1.0, %v126
    %v128 = vrcp.pop %v96
    %v129 = vmul.f32 %v96, %v128
    %v130 = vsub.f32 1.0, %v129
    %v131 = vmul.f32 %v128, %v130
    %v132 = vadd.f32 %v128, %v131
    %vm133 = vweird.f32 %v96
    %vm134 = vweird.f32 %v128
    %vm135 = vmor %vm133, %vm134
    %v136 = vsel %vm135, %v128, %v132
    %v137 = vand.u32 2147483647, %v96
    %vm138 = vcmp.eq.f32.partialorder %v137, 8.507059e+37
    %v139 = vand.u32 %v96, 2147483648
    %v140 = vor.u32 1.1754944e-38, %v139
    %v141 = vsel %vm138, %v140, %v136
    %v142 = vmul.f32 1.0, %v141
    %v143 = vrcp.pop %v97
    %v144 = vmul.f32 %v97, %v143
    %v145 = vsub.f32 1.0, %v144
    %v146 = vmul.f32 %v143, %v145
    %v147 = vadd.f32 %v143, %v146
    %vm148 = vweird.f32 %v97
    %vm149 = vweird.f32 %v143
    %vm150 = vmor %vm148, %vm149
    %v151 = vsel %vm150, %v143, %v147
    %v152 = vand.u32 2147483647, %v97
    %vm153 = vcmp.eq.f32.partialorder %v152, 8.507059e+37
    %v154 = vand.u32 %v97, 2147483648
    %v155 = vor.u32 1.1754944e-38, %v154
    %v156 = vsel %vm153, %v155, %v151
    %v157 = vmul.f32 1.0, %v156
    %vm158 = vcmp.ge.f32.partialorder %v69, 0.0
    %vm159 = vcmp.ge.f32.partialorder %v70, 0.0
    %vm160 = vcmp.ge.f32.partialorder %v71, 0.0
    %vm161 = vcmp.ge.f32.partialorder %v72, 0.0
    %v162 = vmul.f32 %v87, %v112
    %v163 = vmul.f32 %v89, %v127
    %v164 = vmul.f32 %v91, %v142
    %v165 = vmul.f32 %v93, %v157
    %v166 = vsel %vm158, %v112, %v162
    %v167 = vsel %vm159, %v127, %v163
    %v168 = vsel %vm160, %v142, %v164
    %v169 = vsel %vm161, %v157, %v165
    %v170 = vstv %s77
    %v171 = vmul.f32 %v170, %v73
    %v172 = vmul.f32 %v170, %v74
    %v173 = vmul.f32 %v170, %v75
    %v174 = vmul.f32 %v170, %v76
    %s175 = ssub.f32 1.0, %s77
    %v176 = vstv %s175
    %v177 = vmul.f32 %v176, %v166
    %v178 = vmul.f32 %v176, %v167
    %v179 = vmul.f32 %v176, %v168
    %v180 = vmul.f32 %v176, %v169
    %v181 = vadd.f32 %v171, %v177
    %v182 = vadd.f32 %v172, %v178
    %v183 = vadd.f32 %v173, %v179
    %v184 = vadd.f32 %v174, %v180
    %v185 = vmul.f32 %v181, %v73
    %v186 = vmul.f32 %v182, %v74
    %v187 = vmul.f32 %v183, %v75
    %v188 = vmul.f32 %v184, %v76
    %v189 = vmax.f32 %v69, 0.0
    %v190 = vmax.f32 %v70, 0.0
    %v191 = vmax.f32 %v71, 0.0
    %v192 = vmax.f32 %v72, 0.0
    %v193 = vmul.f32 %v69, %v185
    %v194 = vmul.f32 %v70, %v186
    %v195 = vmul.f32 %v71, %v187
    %v196 = vmul.f32 %v72, %v188
    %v197 = vsub.f32 %v189, %v193
    %v198 = vsub.f32 %v190, %v194
    %v199 = vsub.f32 %v191, %v195
    %v200 = vsub.f32 %v192, %v196
    %v201 = vadd.f32 %v87, 1.0
    %v202 = vlog2.pop %v201
    %v203 = vmul.f32 %v202, 0.6931472
    %v204 = vmul.f32 -0.5, %v87
    %v205 = vadd.f32 %v204, 1.0
    %v206 = vmul.f32 %v205, %v87
    %v207 = vand.u32 2147483647, %v87
    %vm208 = vcmp.lt.f32.partialorder %v207, 0.0004427343
    %v209 = vsel %vm208, %v206, %v203
    %v210 = vadd.f32 %v89, 1.0
    %v211 = vlog2.pop %v210
    %v212 = vmul.f32 %v211, 0.6931472
    %v213 = vmul.f32 -0.5, %v89
    %v214 = vadd.f32 %v213, 1.0
    %v215 = vmul.f32 %v214, %v89
    %v216 = vand.u32 2147483647, %v89
    %vm217 = vcmp.lt.f32.partialorder %v216, 0.0004427343
    %v218 = vsel %vm217, %v215, %v212
    %v219 = vadd.f32 %v91, 1.0
    %v220 = vlog2.pop %v219
    %v221 = vmul.f32 %v220, 0.6931472
    %v222 = vmul.f32 -0.5, %v91
    %v223 = vadd.f32 %v222, 1.0
    %v224 = vmul.f32 %v223, %v91
    %v225 = vand.u32 2147483647, %v91
    %vm226 = vcmp.lt.f32.partialorder %v225, 0.0004427343
    %v227 = vsel %vm226, %v224, %v221
    %v228 = vadd.f32 %v93, 1.0
    %v229 = vlog2.pop %v228
    %v230 = vmul.f32 %v229, 0.6931472
    %v231 = vmul.f32 -0.5, %v93
    %v232 = vadd.f32 %v231, 1.0
    %v233 = vmul.f32 %v232, %v93
    %v234 = vand.u32 2147483647, %v93
    %vm235 = vcmp.lt.f32.partialorder %v234, 0.0004427343
    %v236 = vsel %vm235, %v233, %v230
    %v237 = vadd.f32 %v197, %v209
    %v238 = vadd.f32 %v198, %v218
    %v239 = vadd.f32 %v199, %v227
    %v240 = vadd.f32 %v200, %v236
    %v241 = vld [vmem:[#allocation2] sm:$0xff]
    %v242 = vld [vmem:[#allocation2 + $0x8] sm:$0xff]
    %v243 = vld [vmem:[#allocation2 + $0x10] sm:$0xff]
    %v244 = vld [vmem:[#allocation2 + $0x18] sm:$0xff]
    %v245 = vadd.f32 %v237, 0.0
    %v246 = vadd.f32 %v238, 0.0
    %v247 = vadd.f32 %v239, 0.0
    %v248 = vadd.f32 %v240, 0.0
    %v249 = vadd.f32 %v241, %v245
    %v250 = vadd.f32 %v242, %v246
    %v251 = vadd.f32 %v243, %v247
    %v252 = vadd.f32 %v244, %v248
    %253 = vst [vmem:[#allocation2] sm:$0xff] %v249
    %254 = vst [vmem:[#allocation2 + $0x8] sm:$0xff] %v250
    %255 = vst [vmem:[#allocation2 + $0x10] sm:$0xff] %v251
    %256 = vst [vmem:[#allocation2 + $0x18] sm:$0xff] %v252
    %v257 = vld [vmem:[#allocation3] sm:$0xff]
    %v258 = vld [vmem:[#allocation3 + $0x8] sm:$0xff]
    %v259 = vld [vmem:[#allocation3 + $0x10] sm:$0xff]
    %v260 = vld [vmem:[#allocation3 + $0x18] sm:$0xff]
    %v261 = vadd.f32 %v257, %v245
    %v262 = vadd.f32 %v258, %v246
    %v263 = vadd.f32 %v259, %v247
    %v264 = vadd.f32 %v260, %v248
    %265 = vst [vmem:[#allocation3] sm:$0xff] %v261
    %266 = vst [vmem:[#allocation3 + $0x8] sm:$0xff] %v262
    %267 = vst [vmem:[#allocation3 + $0x10] sm:$0xff] %v263
    %268 = vst [vmem:[#allocation3 + $0x18] sm:$0xff] %v264
    // Predicated region
    $region26: #{tpu_custom_call.1} parent=1 // pred_check
      %p269 = pneg %p57
    $region27: #{tpu_custom_call.1} parent=1 // pred_check_branch
      %271 = sbr.rel (%p269) target = $region29
    $region28: #{tpu_custom_call.1} parent=1 // pred_region
      %v272 = vld [vmem:[#allocation2] sm:$0xff]
      %v273 = vld [vmem:[#allocation2 + $0x8] sm:$0xff]
      %v274 = vld [vmem:[#allocation2 + $0x10] sm:$0xff]
      %v275 = vld [vmem:[#allocation2 + $0x18] sm:$0xff]
      %v276 = vadd.f32 %v272, %v273
      %v277 = vadd.f32 %v276, %v274
      %v278 = vadd.f32 %v277, %v275
      %279 = vadd.xlane.f32.xlu0 %v278
      %v280 = vpop.xlane.xlu0 %279
      %v281 = vrot.slane %v280, 4
      %v282 = vadd.f32 %v280, %v281
      %v283 = vrot.slane %v282, 2
      %v284 = vadd.f32 %v282, %v283
      %v285 = vrot.slane %v284, 1
      %v286 = vadd.f32 %v284, %v285
      %s287 = vtos %v286
      %s288 = scalar_lea.smem [#allocation10], 0
      %289 = sst [smem:[%s288]] %s287
      %v290 = vld [vmem:[#allocation3] sm:$0xff]
      %v291 = vld [vmem:[#allocation3 + $0x8] sm:$0xff]
      %v292 = vld [vmem:[#allocation3 + $0x10] sm:$0xff]
      %v293 = vld [vmem:[#allocation3 + $0x18] sm:$0xff]
      %v294 = vadd.f32 %v290, %v291
      %v295 = vadd.f32 %v294, %v292
      %v296 = vadd.f32 %v295, %v293
      %297 = vadd.xlane.f32.xlu0 %v296
      %v298 = vpop.xlane.xlu0 %297
      %v299 = vrot.slane %v298, 4
      %v300 = vadd.f32 %v298, %v299
      %v301 = vrot.slane %v300, 2
      %v302 = vadd.f32 %v300, %v301
      %v303 = vrot.slane %v302, 1
      %v304 = vadd.f32 %v302, %v303
      %s305 = vtos %v304
      %s306 = scalar_lea.smem [#allocation11], 0
      %307 = sst [smem:[%s306]] %s305
    $region29: #{tpu_custom_call.1} parent=1 // pred_fallthru
      _
    // Predicated region
    $region30: #{tpu_custom_call.1} parent=1 // pred_check
      _
    $region31: #{tpu_custom_call.1} parent=1 // pred_check_branch
      %309 = sbr.rel (0) target = $region33
    $region32: #{tpu_custom_call.1} parent=1 // pred_region
      %311 = vsyncadd [#allocation7], 0
      %s313 = sshll.u32 %s3, 4
      %s314 = int_to_ptr.hbm [resolvable:$true] %s313
      %316 = dma.smem_to_hbm [#allocation10], 16, %s314, [#allocation7]
    $region33: #{tpu_custom_call.1} parent=1 // pred_fallthru
      _
    // Predicated region
    $region34: #{tpu_custom_call.1} parent=1 // pred_check
      _
    $region35: #{tpu_custom_call.1} parent=1 // pred_check_branch
      %318 = sbr.rel (0) target = $region37
    $region36: #{tpu_custom_call.1} parent=1 // pred_region
      %320 = vsyncadd [#allocation12], 0
      %s322 = sshll.u32 %s4, 4
      %s323 = int_to_ptr.hbm [resolvable:$true] %s322
      %325 = dma.smem_to_hbm [#allocation11], 16, %s323, [#allocation12]
    $region37: #{tpu_custom_call.1} parent=1 // pred_fallthru
      _
    // Predicated region
    $region38: #{tpu_custom_call.1} parent=1 // pred_check
      _
    $region39: #{tpu_custom_call.1} parent=1 // pred_check_branch
      %327 = sbr.rel (0) target = $region41
    $region40: #{tpu_custom_call.1} parent=1 // pred_region
      %329 = dma.done [#allocation7], 16
    $region41: #{tpu_custom_call.1} parent=1 // pred_fallthru
      _
    // Predicated region
    $region42: #{tpu_custom_call.1} parent=1 // pred_check
      _
    $region43: #{tpu_custom_call.1} parent=1 // pred_check_branch
      %331 = sbr.rel (0) target = $region45
    $region44: #{tpu_custom_call.1} parent=1 // pred_region
      %333 = dma.done [#allocation12], 16
    $region45: #{tpu_custom_call.1} parent=1 // pred_fallthru
      _
    %334 = sfence
    %335 = vsyncpa [#allocation6], 1
    %336 = vsyncpa [#allocation9], 1
    %337 = vsyncpa [#allocation7], 1
    %338 = vsyncpa [#allocation12], 1

</llo_original>
